<compile_context>
chip_gen: v5e
topology: v5e:2x2
jax: 0.10.0
libtpu: 0.0.40
codegen_flags: <defaults>
</compile_context>

<pallas_src>
import functools

import jax
import jax.numpy as jnp
import numpy as np
from jax.experimental import pallas as pl
from jax.experimental.pallas import tpu as pltpu

MC_SAMPLES = 10
DROPOUT_P = 0.2

_LANE_COLS = 512            # lane-dense column width (multiple of 128)
_MAX_ROWS_PER_BLOCK = 1024  # ~2 MiB per f32 input block at 512 cols


def _draw_keep_masks(key, n_samples, keep_prob, shape):
    """Bernoulli keep masks (True = kept), one per MC sample, original element order."""
    return jax.random.bernoulli(key, keep_prob, (n_samples,) + tuple(shape))


def _mc_dropout_kernel(x_ref, bits_ref, mean_ref, unc_ref, *, n_samples, dropout_p):
    x = x_ref[...].astype(jnp.float32)
    bits = bits_ref[...]                      # int32, bit i = keep decision of sample i

    # keep-count k[e] = popcount of the n_samples mask bits (unrolled; VPU filler).
    k = jnp.zeros(bits.shape, jnp.int32)
    for i in range(n_samples):
        k = k + ((bits >> i) & 1)
    kf = k.astype(jnp.float32)

    inv_n = jnp.float32(1.0 / n_samples)
    inv_nm1 = jnp.float32(1.0 / (n_samples - 1))
    keep_scale = jnp.float32(1.0 / (1.0 - dropout_p))

    xs = x * keep_scale
    mean = xs * (kf * inv_n)
    # Exact sum of squared deviations for 0/1 masks: xs^2 * (k - k^2/n); clamp >= 0.
    ssd = (xs * xs) * jnp.maximum(kf - (kf * kf) * inv_n, jnp.float32(0.0))
    unc = jnp.sqrt(ssd * inv_nm1)

    mean_ref[...] = mean.astype(mean_ref.dtype)
    unc_ref[...] = unc.astype(unc_ref.dtype)


def mc_dropout_uncertainty(x, key, *, dropout_p=DROPOUT_P, n_samples=MC_SAMPLES):
    """Pallas implementation of UncertaintyEstimator.forward -> (mean, uncertainty)."""
    orig_shape = x.shape
    n_elem = int(x.size)

    # --- host-side randomness: pack the 10 keep bits into one int32 per element.
    keep = _draw_keep_masks(key, n_samples, 1.0 - dropout_p, orig_shape)
    bits = jnp.zeros(orig_shape, jnp.int32)
    for i in range(n_samples):
        bits = bits | (keep[i].astype(jnp.int32) << i)

    # --- lane-dense packing: flatten all elements, pad, reshape to (rows, 512).
    cols = _LANE_COLS
    rows = pl.cdiv(n_elem, cols)
    if rows <= 8:
        tb = rows                                       # single small block
    else:
        # >= ~4 grid steps (feeds both v7x TCs), rows multiple of 8, capped by VMEM budget.
        tb = min(_MAX_ROWS_PER_BLOCK, max(8, ((pl.cdiv(rows, 4) + 7) // 8) * 8))
    rows_pad = tb * pl.cdiv(rows, tb)
    pad = rows_pad * cols - n_elem

    x_flat = jnp.pad(x.reshape(-1), (0, pad)).reshape(rows_pad, cols)
    b_flat = jnp.pad(bits.reshape(-1), (0, pad)).reshape(rows_pad, cols)

    grid = (rows_pad // tb,)
    kernel = functools.partial(
        _mc_dropout_kernel, n_samples=n_samples, dropout_p=dropout_p
    )

    mean2, unc2 = pl.pallas_call(
        kernel,
        out_shape=(
            jax.ShapeDtypeStruct((rows_pad, cols), x_flat.dtype),
            jax.ShapeDtypeStruct((rows_pad, cols), x_flat.dtype),
        ),
        grid=grid,
        in_specs=[
            pl.BlockSpec((tb, cols), lambda i: (i, 0)),
            pl.BlockSpec((tb, cols), lambda i: (i, 0)),
        ],
        out_specs=(
            pl.BlockSpec((tb, cols), lambda i: (i, 0)),
            pl.BlockSpec((tb, cols), lambda i: (i, 0)),
        ),
        compiler_params=pltpu.CompilerParams(
            dimension_semantics=("parallel",),
            vmem_limit_bytes=48 * 1024 * 1024,   # fits v7x's 64 MiB physical VMEM
        ),
    )(x_flat, b_flat)

    mean = mean2.reshape(-1)[:n_elem].reshape(orig_shape)
    unc = unc2.reshape(-1)[:n_elem].reshape(orig_shape)
    return mean, unc


if __name__ == "__main__":
    key = jax.random.PRNGKey(0)
    k_x, k_mask = jax.random.split(key)

    # Small demo input consistent with the module (any tensor shape is accepted).
    x = jax.random.normal(k_x, (2, 4, 16, 16), jnp.float32)

    mean_pred, uncertainty = mc_dropout_uncertainty(x, k_mask)
    jax.block_until_ready((mean_pred, uncertainty))

    # Reference: identical keep masks (same key / same draw), float64 math on host.
    keep_np = np.asarray(_draw_keep_masks(k_mask, MC_SAMPLES, 1.0 - DROPOUT_P, x.shape))
    x64 = np.asarray(x, dtype=np.float64)
    preds = np.where(keep_np, x64[None] / (1.0 - DROPOUT_P), 0.0)
    ref_mean = preds.mean(axis=0)
    ref_std = preds.std(axis=0, ddof=1)   # torch.std default: unbiased (n-1)

    mean_np = np.asarray(mean_pred, dtype=np.float64)
    unc_np = np.asarray(uncertainty, dtype=np.float64)

    assert mean_pred.shape == x.shape and uncertainty.shape == x.shape
    assert np.all(np.isfinite(unc_np)) and np.all(unc_np >= 0.0)
    # Mean has no transcendental: tight check (also validates masks/packing/layout).
    assert np.allclose(mean_np, ref_mean, atol=1e-5, rtol=1e-5)
    # Std adds one in-kernel sqrt whose backend lowering may be an approximation at
    # the <=1e-3 level; 5e-3 tolerance still catches any mask / formula / layout
    # error (those manifest at the several-percent level).
    assert np.allclose(unc_np, ref_std, atol=5e-3, rtol=5e-3)

    print("KERNEL_OK")
</pallas_src>

<mosaic_0001>
module attributes {stable_mosaic.version = 11 : i64} {
  func.func @_mc_dropout_kernel(%arg0: i32, %arg1: memref<4x512xf32, #tpu.memory_space<vmem>>, %arg2: memref<4x512xi32, #tpu.memory_space<vmem>>, %arg3: memref<4x512xf32, #tpu.memory_space<vmem>>, %arg4: memref<4x512xf32, #tpu.memory_space<vmem>>) attributes {dimension_semantics = [#tpu.dimension_semantics<parallel>], iteration_bounds = array<i64: 1>, scalar_prefetch = 0 : i64, scratch_operands = 0 : i64, tpu.core_type = #tpu.core_type<tc>, window_params = [{transform_indices = @transform_0, window_bounds = array<i64: 4, 512>}, {transform_indices = @transform_1, window_bounds = array<i64: 4, 512>}, {transform_indices = @transform_2, window_bounds = array<i64: 4, 512>}, {transform_indices = @transform_3, window_bounds = array<i64: 4, 512>}]} {
    %c0 = arith.constant 0 : index
    %c0_0 = arith.constant 0 : index
    %0 = vector.load %arg1[%c0, %c0_0] : memref<4x512xf32, #tpu.memory_space<vmem>>, vector<4x512xf32>
    %c0_1 = arith.constant 0 : index
    %c0_2 = arith.constant 0 : index
    %1 = vector.load %arg2[%c0_1, %c0_2] : memref<4x512xi32, #tpu.memory_space<vmem>>, vector<4x512xi32>
    %c0_i32 = arith.constant 0 : i32
    %2 = vector.broadcast %c0_i32 : i32 to vector<4x512xi32>
    %c0_i32_3 = arith.constant 0 : i32
    %3 = vector.broadcast %c0_i32_3 : i32 to vector<4x512xi32>
    %4 = arith.shrsi %1, %3 : vector<4x512xi32>
    %c1_i32 = arith.constant 1 : i32
    %5 = vector.broadcast %c1_i32 : i32 to vector<4x512xi32>
    %6 = arith.andi %4, %5 : vector<4x512xi32>
    %7 = arith.addi %2, %6 : vector<4x512xi32>
    %c1_i32_4 = arith.constant 1 : i32
    %8 = vector.broadcast %c1_i32_4 : i32 to vector<4x512xi32>
    %9 = arith.shrsi %1, %8 : vector<4x512xi32>
    %c1_i32_5 = arith.constant 1 : i32
    %10 = vector.broadcast %c1_i32_5 : i32 to vector<4x512xi32>
    %11 = arith.andi %9, %10 : vector<4x512xi32>
    %12 = arith.addi %7, %11 : vector<4x512xi32>
    %c2_i32 = arith.constant 2 : i32
    %13 = vector.broadcast %c2_i32 : i32 to vector<4x512xi32>
    %14 = arith.shrsi %1, %13 : vector<4x512xi32>
    %c1_i32_6 = arith.constant 1 : i32
    %15 = vector.broadcast %c1_i32_6 : i32 to vector<4x512xi32>
    %16 = arith.andi %14, %15 : vector<4x512xi32>
    %17 = arith.addi %12, %16 : vector<4x512xi32>
    %c3_i32 = arith.constant 3 : i32
    %18 = vector.broadcast %c3_i32 : i32 to vector<4x512xi32>
    %19 = arith.shrsi %1, %18 : vector<4x512xi32>
    %c1_i32_7 = arith.constant 1 : i32
    %20 = vector.broadcast %c1_i32_7 : i32 to vector<4x512xi32>
    %21 = arith.andi %19, %20 : vector<4x512xi32>
    %22 = arith.addi %17, %21 : vector<4x512xi32>
    %c4_i32 = arith.constant 4 : i32
    %23 = vector.broadcast %c4_i32 : i32 to vector<4x512xi32>
    %24 = arith.shrsi %1, %23 : vector<4x512xi32>
    %c1_i32_8 = arith.constant 1 : i32
    %25 = vector.broadcast %c1_i32_8 : i32 to vector<4x512xi32>
    %26 = arith.andi %24, %25 : vector<4x512xi32>
    %27 = arith.addi %22, %26 : vector<4x512xi32>
    %c5_i32 = arith.constant 5 : i32
    %28 = vector.broadcast %c5_i32 : i32 to vector<4x512xi32>
    %29 = arith.shrsi %1, %28 : vector<4x512xi32>
    %c1_i32_9 = arith.constant 1 : i32
    %30 = vector.broadcast %c1_i32_9 : i32 to vector<4x512xi32>
    %31 = arith.andi %29, %30 : vector<4x512xi32>
    %32 = arith.addi %27, %31 : vector<4x512xi32>
    %c6_i32 = arith.constant 6 : i32
    %33 = vector.broadcast %c6_i32 : i32 to vector<4x512xi32>
    %34 = arith.shrsi %1, %33 : vector<4x512xi32>
    %c1_i32_10 = arith.constant 1 : i32
    %35 = vector.broadcast %c1_i32_10 : i32 to vector<4x512xi32>
    %36 = arith.andi %34, %35 : vector<4x512xi32>
    %37 = arith.addi %32, %36 : vector<4x512xi32>
    %c7_i32 = arith.constant 7 : i32
    %38 = vector.broadcast %c7_i32 : i32 to vector<4x512xi32>
    %39 = arith.shrsi %1, %38 : vector<4x512xi32>
    %c1_i32_11 = arith.constant 1 : i32
    %40 = vector.broadcast %c1_i32_11 : i32 to vector<4x512xi32>
    %41 = arith.andi %39, %40 : vector<4x512xi32>
    %42 = arith.addi %37, %41 : vector<4x512xi32>
    %c8_i32 = arith.constant 8 : i32
    %43 = vector.broadcast %c8_i32 : i32 to vector<4x512xi32>
    %44 = arith.shrsi %1, %43 : vector<4x512xi32>
    %c1_i32_12 = arith.constant 1 : i32
    %45 = vector.broadcast %c1_i32_12 : i32 to vector<4x512xi32>
    %46 = arith.andi %44, %45 : vector<4x512xi32>
    %47 = arith.addi %42, %46 : vector<4x512xi32>
    %c9_i32 = arith.constant 9 : i32
    %48 = vector.broadcast %c9_i32 : i32 to vector<4x512xi32>
    %49 = arith.shrsi %1, %48 : vector<4x512xi32>
    %c1_i32_13 = arith.constant 1 : i32
    %50 = vector.broadcast %c1_i32_13 : i32 to vector<4x512xi32>
    %51 = arith.andi %49, %50 : vector<4x512xi32>
    %52 = arith.addi %47, %51 : vector<4x512xi32>
    %53 = arith.sitofp %52 : vector<4x512xi32> to vector<4x512xf32>
    %cst = arith.constant 1.250000e+00 : f32
    %54 = vector.broadcast %cst : f32 to vector<4x512xf32>
    %55 = arith.mulf %0, %54 : vector<4x512xf32>
    %cst_14 = arith.constant 1.000000e-01 : f32
    %56 = vector.broadcast %cst_14 : f32 to vector<4x512xf32>
    %57 = arith.mulf %53, %56 : vector<4x512xf32>
    %58 = arith.mulf %55, %57 : vector<4x512xf32>
    %59 = arith.mulf %55, %55 : vector<4x512xf32>
    %60 = arith.mulf %53, %53 : vector<4x512xf32>
    %cst_15 = arith.constant 1.000000e-01 : f32
    %61 = vector.broadcast %cst_15 : f32 to vector<4x512xf32>
    %62 = arith.mulf %60, %61 : vector<4x512xf32>
    %63 = arith.subf %53, %62 : vector<4x512xf32>
    %cst_16 = arith.constant 0.000000e+00 : f32
    %64 = vector.broadcast %cst_16 : f32 to vector<4x512xf32>
    %65 = arith.maximumf %63, %64 : vector<4x512xf32>
    %66 = arith.mulf %59, %65 : vector<4x512xf32>
    %cst_17 = arith.constant 0.111111112 : f32
    %67 = vector.broadcast %cst_17 : f32 to vector<4x512xf32>
    %68 = arith.mulf %66, %67 : vector<4x512xf32>
    %69 = math.sqrt %68 : vector<4x512xf32>
    %c0_18 = arith.constant 0 : index
    %c0_19 = arith.constant 0 : index
    %70 = vector.load %arg3[%c0_18, %c0_19] : memref<4x512xf32, #tpu.memory_space<vmem>>, vector<4x512xf32>
    tpu.vector_store %arg3[%c0_18, %c0_19], %58 {strides = array<i32>} : memref<4x512xf32, #tpu.memory_space<vmem>>, vector<4x512xf32>,
    %c0_20 = arith.constant 0 : index
    %c0_21 = arith.constant 0 : index
    %71 = vector.load %arg4[%c0_20, %c0_21] : memref<4x512xf32, #tpu.memory_space<vmem>>, vector<4x512xf32>
    tpu.vector_store %arg4[%c0_20, %c0_21], %69 {strides = array<i32>} : memref<4x512xf32, #tpu.memory_space<vmem>>, vector<4x512xf32>,
    return
  }
  func.func @transform_0(%arg0: i32) -> (i32, i32) {
    %c0_i32 = arith.constant 0 : i32
    %c0_i32_0 = arith.constant 0 : i32
    return %arg0, %c0_i32 : i32, i32
  }
  func.func @transform_1(%arg0: i32) -> (i32, i32) {
    %c0_i32 = arith.constant 0 : i32
    %c0_i32_0 = arith.constant 0 : i32
    return %arg0, %c0_i32 : i32, i32
  }
  func.func @transform_2(%arg0: i32) -> (i32, i32) {
    %c0_i32 = arith.constant 0 : i32
    %c0_i32_0 = arith.constant 0 : i32
    return %arg0, %c0_i32 : i32, i32
  }
  func.func @transform_3(%arg0: i32) -> (i32, i32) {
    %c0_i32 = arith.constant 0 : i32
    %c0_i32_0 = arith.constant 0 : i32
    return %arg0, %c0_i32 : i32, i32
  }
}

</mosaic_0001>

<llo_original>
// kernel: tpu_custom_call.1
$region0: #{tpu_custom_call.1}
  #allocation0 [shape = 'u32[]', space=smem, size = 0x4, offset = 0x4, fixed_abs, tag = 'smem constant byte address 0x4 - core index']
  #allocation1 [shape = 'u32[72,128]{1,0:T(1,128)}', space=vmem, size = 0x9000, scoped, tag = 'internal scratch']
  %s0 = inlined_call_operand.hbm [shape: f32[4,512], index: 0, kind: input, shape index: {}]
  %s1 = inlined_call_operand.hbm [shape: s32[4,512], index: 1, kind: input, shape index: {}]
  %s2 = inlined_call_operand.hbm [shape: f32[4,512], index: 2, kind: output, shape index: {0}]
  %s3 = inlined_call_operand.hbm [shape: f32[4,512], index: 3, kind: output, shape index: {1}]
  %4 = xla_tuple %s2, %s3
  %s5 = sld [smem:[#allocation0]]
  $region34: #{tpu_custom_call.1} parent=0
    _
  %s7 = ssub.s32 1, %s5
  %s8 = scalar_select 0, %s7, %s5
  $region1: #{tpu_custom_call.1} parent=0
    #allocation2 [shape = 'u8[8192]{0}', space=vmem, size = 0x2000, scoped, tag = 'input window, operand 0, single buffered']
    #allocation3 [shape = 's32[1]{0}', space=sflag, size = 0x4, scoped, tag = 'scoped memory for tpu_custom_call.1']
    #allocation4 [shape = 's32[1]{0}', space=sflag, size = 0x4, scoped, tag = 'scoped memory for tpu_custom_call.1']
    #allocation5 [shape = 'u8[8192]{0}', space=vmem, size = 0x2000, scoped, tag = 'input window, operand 1, single buffered']
    #allocation6 [shape = 's32[1]{0}', space=sflag, size = 0x4, scoped, tag = 'scoped memory for tpu_custom_call.1']
    #allocation7 [shape = 'u8[8192]{0}', space=vmem, size = 0x2000, scoped, tag = 'output window, operand 0, single buffered']
    #allocation8 [shape = 'u8[8192]{0}', space=vmem, size = 0x2000, scoped, tag = 'output window, operand 1, single buffered']
    #allocation9 [shape = 's32[1]{0}', space=sflag, size = 0x4, scoped, tag = 'scoped memory for tpu_custom_call.1']
    %9 = vsyncpa [#allocation3], 0
    %10 = vsyncpa [#allocation6], 0
    %11 = vsyncpa [#allocation4], 0
    %12 = vsyncpa [#allocation9], 0
    // Predicated region
    $region2: #{tpu_custom_call.1} parent=1 // pred_check
      _
    $region3: #{tpu_custom_call.1} parent=1 // pred_check_branch
      %14 = sbr.rel (0) target = $region5
    $region4: #{tpu_custom_call.1} parent=1 // pred_region
      %16 = vsyncadd [#allocation3], 0
      %s18 = sshll.u32 %s0, 4
      %s19 = int_to_ptr.hbm [resolvable:$true] %s18
      %s20 = sshll.u32 [#allocation2], 4
      %s21 = int_to_ptr.vmem [resolvable:$true] %s20
      %23 = dma.hbm_to_vmem [thread:$0]  %s19, 256, %s21, [#allocation3]
    $region5: #{tpu_custom_call.1} parent=1 // pred_fallthru
      _
    // Predicated region
    $region6: #{tpu_custom_call.1} parent=1 // pred_check
      _
    $region7: #{tpu_custom_call.1} parent=1 // pred_check_branch
      %25 = sbr.rel (0) target = $region9
    $region8: #{tpu_custom_call.1} parent=1 // pred_region
      %27 = vsyncadd [#allocation6], 0
      %s29 = sshll.u32 %s1, 4
      %s30 = int_to_ptr.hbm [resolvable:$true] %s29
      %s31 = sshll.u32 [#allocation5], 4
      %s32 = int_to_ptr.vmem [resolvable:$true] %s31
      %34 = dma.hbm_to_vmem [thread:$0]  %s30, 256, %s32, [#allocation6]
    $region9: #{tpu_custom_call.1} parent=1 // pred_fallthru
      _
    // Predicated region
    $region10: #{tpu_custom_call.1} parent=1 // pred_check
      _
    $region11: #{tpu_custom_call.1} parent=1 // pred_check_branch
      %36 = sbr.rel (0) target = $region13
    $region12: #{tpu_custom_call.1} parent=1 // pred_region
      %38 = dma.done [#allocation3], 256
    $region13: #{tpu_custom_call.1} parent=1 // pred_fallthru
      _
    // Predicated region
    $region14: #{tpu_custom_call.1} parent=1 // pred_check
      _
    $region15: #{tpu_custom_call.1} parent=1 // pred_check_branch
      %40 = sbr.rel (0) target = $region17
    $region16: #{tpu_custom_call.1} parent=1 // pred_region
      %42 = dma.done [#allocation6], 256
    $region17: #{tpu_custom_call.1} parent=1 // pred_fallthru
      _
    %v43 = vld [vmem:[#allocation2] sm:$0xff]
    %v44 = vld [vmem:[#allocation2 + $0x8] sm:$0xff]
    %v45 = vld [vmem:[#allocation5] sm:$0xff]
    %v46 = vld [vmem:[#allocation5 + $0x8] sm:$0xff]
    %v47 = vand.u32 %v45, 1
    %v48 = vand.u32 %v46, 1
    %v49 = vshra.s32 %v45, 1
    %v50 = vshra.s32 %v46, 1
    %v51 = vand.u32 %v49, 1
    %v52 = vand.u32 %v50, 1
    %v53 = vadd.s32 %v47, %v51
    %v54 = vadd.s32 %v48, %v52
    %v55 = vshra.s32 %v45, 2
    %v56 = vshra.s32 %v46, 2
    %v57 = vand.u32 %v55, 1
    %v58 = vand.u32 %v56, 1
    %v59 = vadd.s32 %v53, %v57
    %v60 = vadd.s32 %v54, %v58
    %v61 = vshra.s32 %v45, 3
    %v62 = vshra.s32 %v46, 3
    %v63 = vand.u32 %v61, 1
    %v64 = vand.u32 %v62, 1
    %v65 = vadd.s32 %v59, %v63
    %v66 = vadd.s32 %v60, %v64
    %v67 = vshra.s32 %v45, 4
    %v68 = vshra.s32 %v46, 4
    %v69 = vand.u32 %v67, 1
    %v70 = vand.u32 %v68, 1
    %v71 = vadd.s32 %v65, %v69
    %v72 = vadd.s32 %v66, %v70
    %v73 = vshra.s32 %v45, 5
    %v74 = vshra.s32 %v46, 5
    %v75 = vand.u32 %v73, 1
    %v76 = vand.u32 %v74, 1
    %v77 = vadd.s32 %v71, %v75
    %v78 = vadd.s32 %v72, %v76
    %v79 = vshra.s32 %v45, 6
    %v80 = vshra.s32 %v46, 6
    %v81 = vand.u32 %v79, 1
    %v82 = vand.u32 %v80, 1
    %v83 = vadd.s32 %v77, %v81
    %v84 = vadd.s32 %v78, %v82
    %v85 = vshra.s32 %v45, 7
    %v86 = vshra.s32 %v46, 7
    %v87 = vand.u32 %v85, 1
    %v88 = vand.u32 %v86, 1
    %v89 = vadd.s32 %v83, %v87
    %v90 = vadd.s32 %v84, %v88
    %v91 = vshra.s32 %v45, 8
    %v92 = vshra.s32 %v46, 8
    %v93 = vand.u32 %v91, 1
    %v94 = vand.u32 %v92, 1
    %v95 = vadd.s32 %v89, %v93
    %v96 = vadd.s32 %v90, %v94
    %v97 = vshra.s32 %v45, 9
    %v98 = vshra.s32 %v46, 9
    %v99 = vand.u32 %v97, 1
    %v100 = vand.u32 %v98, 1
    %v101 = vadd.s32 %v95, %v99
    %v102 = vadd.s32 %v96, %v100
    %v103 = vcvt.s32.f32 %v101
    %v104 = vcvt.s32.f32 %v102
    %v105 = vmul.f32 %v43, 1.25
    %v106 = vmul.f32 %v44, 1.25
    %v107 = vmul.f32 %v103, 0.1
    %v108 = vmul.f32 %v104, 0.1
    %v109 = vmul.f32 %v105, %v107
    %v110 = vmul.f32 %v106, %v108
    %v111 = vmul.f32 %v105, %v105
    %v112 = vmul.f32 %v106, %v106
    %v113 = vmul.f32 %v103, %v103
    %v114 = vmul.f32 %v104, %v104
    %v115 = vmul.f32 %v113, 0.1
    %v116 = vmul.f32 %v114, 0.1
    %v117 = vsub.f32 %v103, %v115
    %v118 = vsub.f32 %v104, %v116
    %v119 = vmax.f32 %v117, 0.0
    %v120 = vmax.f32 %v118, 0.0
    %v121 = vmul.f32 %v111, %v119
    %v122 = vmul.f32 %v112, %v120
    %v123 = vmul.f32 %v121, 0.11111111
    %v124 = vmul.f32 %v122, 0.11111111
    %v125 = vrsqrt.pop %v123
    %v126 = vmul.f32 %v125, %v123
    %v127 = vmul.f32 %v126, %v125
    %v128 = vmul.f32 0.5, %v127
    %v129 = vsub.f32 1.5, %v128
    %v130 = vmul.f32 %v125, %v129
    %v131 = vmul.f32 %v123, %v130
    %vm132 = vcmp.eq.f32.partialorder %v123, inf
    %v133 = vsel %vm132, %v123, %v131
    %vm134 = vcmp.eq.f32.partialorder %v123, 0.0
    %v135 = vand.u32 %v123, 2147483648
    %v136 = vsel %vm134, %v135, %v133
    %v137 = vrsqrt.pop %v124
    %v138 = vmul.f32 %v137, %v124
    %v139 = vmul.f32 %v138, %v137
    %v140 = vmul.f32 0.5, %v139
    %v141 = vsub.f32 1.5, %v140
    %v142 = vmul.f32 %v137, %v141
    %v143 = vmul.f32 %v124, %v142
    %vm144 = vcmp.eq.f32.partialorder %v124, inf
    %v145 = vsel %vm144, %v124, %v143
    %vm146 = vcmp.eq.f32.partialorder %v124, 0.0
    %v147 = vand.u32 %v124, 2147483648
    %v148 = vsel %vm146, %v147, %v145
    %149 = vst [vmem:[#allocation7] sm:$0xff] %v109
    %150 = vst [vmem:[#allocation7 + $0x8] sm:$0xff] %v110
    %151 = vst [vmem:[#allocation8] sm:$0xff] %v136
    %152 = vst [vmem:[#allocation8 + $0x8] sm:$0xff] %v148
    // Predicated region
    $region18: #{tpu_custom_call.1} parent=1 // pred_check
      _
    $region19: #{tpu_custom_call.1} parent=1 // pred_check_branch
      %154 = sbr.rel (0) target = $region21
    $region20: #{tpu_custom_call.1} parent=1 // pred_region
      %156 = vsyncadd [#allocation4], 0
      %s158 = sshll.u32 [#allocation7], 4
      %s159 = int_to_ptr.vmem [resolvable:$true] %s158
      %s160 = sshll.u32 %s2, 4
      %s161 = int_to_ptr.hbm [resolvable:$true] %s160
      %163 = dma.vmem_to_hbm [thread:$0]  %s159, 256, %s161, [#allocation4]
    $region21: #{tpu_custom_call.1} parent=1 // pred_fallthru
      _
    // Predicated region
    $region22: #{tpu_custom_call.1} parent=1 // pred_check
      _
    $region23: #{tpu_custom_call.1} parent=1 // pred_check_branch
      %165 = sbr.rel (0) target = $region25
    $region24: #{tpu_custom_call.1} parent=1 // pred_region
      %167 = vsyncadd [#allocation9], 0
      %s169 = sshll.u32 [#allocation8], 4
      %s170 = int_to_ptr.vmem [resolvable:$true] %s169
      %s171 = sshll.u32 %s3, 4
      %s172 = int_to_ptr.hbm [resolvable:$true] %s171
      %174 = dma.vmem_to_hbm [thread:$0]  %s170, 256, %s172, [#allocation9]
    $region25: #{tpu_custom_call.1} parent=1 // pred_fallthru
      _
    // Predicated region
    $region26: #{tpu_custom_call.1} parent=1 // pred_check
      _
    $region27: #{tpu_custom_call.1} parent=1 // pred_check_branch
      %176 = sbr.rel (0) target = $region29
    $region28: #{tpu_custom_call.1} parent=1 // pred_region
      %178 = dma.done [#allocation4], 256
    $region29: #{tpu_custom_call.1} parent=1 // pred_fallthru
      _
    // Predicated region
    $region30: #{tpu_custom_call.1} parent=1 // pred_check
      _
    $region31: #{tpu_custom_call.1} parent=1 // pred_check_branch
      %180 = sbr.rel (0) target = $region33
    $region32: #{tpu_custom_call.1} parent=1 // pred_region
      %182 = dma.done [#allocation9], 256
    $region33: #{tpu_custom_call.1} parent=1 // pred_fallthru
      _
    %183 = vsyncpa [#allocation3], 1
    %184 = vsyncpa [#allocation6], 1
    %185 = vsyncpa [#allocation4], 1
    %186 = vsyncpa [#allocation9], 1

</llo_original>
